<compile_context>
chip_gen: v5e
topology: v5e:2x2
jax: 0.10.0
libtpu: 0.0.40
codegen_flags: <defaults>
</compile_context>

<pallas_src>
import numpy as np
import jax
import jax.numpy as jnp
from jax.experimental import pallas as pl
from jax.experimental.pallas import tpu as pltpu

# ---- stand-ins for inf_common.HP -------------------------------------------
BOTTLENECK_EXPANSION_RATIO = 4     # HP.BOTTLENECK_EXPANSION_RATIO
USE_TANH = True                    # HP.NONLIN == HP.NonLinKind_TANH
# TODO(synk): other HP knobs of inf_common are irrelevant to SineEmbellisher.

_LANES = 128


def _round_up(x, m):
    return (x + m - 1) // m * m


def _block_diag(mat, n):
    """Block-diagonal replication of a 2-D matrix, n blocks."""
    if n == 1:
        return mat
    r, c = mat.shape
    out = jnp.zeros((n * r, n * c), mat.dtype)
    for f in range(n):
        out = out.at[f * r:(f + 1) * r, f * c:(f + 1) * c].set(mat)
    return out


def _choose_row_tile(bf, max_tile=2048):
    """Folded-row tile: as large as is useful, multiple of 8 sublanes, and
    at least 2 grid steps when there is enough work (v7x megacore)."""
    if bf > max_tile:
        return max_tile                       # many steps, 2048*128*4B = 1 MiB/tile
    if bf >= 1024:
        return _round_up(pl.cdiv(bf, 2), 8)   # exactly 2 steps for 2 TensorCores
    return bf                                  # single full-extent block (always legal)


def build_sine_embellisher_kernel(effective_max: float, use_tanh: bool):
    eff = float(effective_max)
    inv_max = 1.0 / eff

    def kernel(sine_ref,            # (TB, FOLD)        int32
               emb_ref,             # (TB, FOLD*D)      f32
               w1_ref,              # (FOLD*D, FOLD*H)  f32  block-diag(embed part of W1)
               w1s_ref,             # (FOLD,   FOLD*H)  f32  block-diag(sine row of W1)
               b1_ref,              # (1,      FOLD*H)  f32
               w2_ref,              # (FOLD*H, FOLD*D)  f32  block-diag(W2)
               b2_ref,              # (1,      FOLD*D)  f32
               out_ref):            # (TB, FOLD*D)      f32
        s = sine_ref[...]                                           # (TB, FOLD) int32
        val = jnp.where(s == 255, eff, s.astype(jnp.float32)) * inv_max

        # cat(embed, [val]) @ W1  ==  embed @ W1[:D]  +  val * W1[D]   (block-diag form)
        h = jnp.dot(emb_ref[...], w1_ref[...],
                    preferred_element_type=jnp.float32)
        h = h + jnp.dot(val, w1s_ref[...],
                        preferred_element_type=jnp.float32) + b1_ref[...]
        h = jnp.tanh(h) if use_tanh else jnp.maximum(h, 0.0)

        y = jnp.dot(h, w2_ref[...],
                    preferred_element_type=jnp.float32) + b2_ref[...]
        out_ref[...] = y.astype(out_ref.dtype)

    return kernel


def sine_embellisher_forward(sine, embed, w1, b1, w2, b2, *,
                             effective_max, use_tanh=USE_TANH, max_row_tile=2048):
    """Batched SineEmbellisher forward.

    sine:  (B,)   int32 sine values (255 is the "max" sentinel)
    embed: (B, D) f32 embeddings
    w1:    (D+1, H), b1: (H,)   -- first Linear (as x @ w1 + b1)
    w2:    (H, D),   b2: (D,)   -- second Linear
    """
    B, D = embed.shape
    H = w1.shape[1]
    assert w1.shape == (D + 1, H)

    # Fold FOLD rows into the lane dimension so every tensor is lane-dense
    # (D=32 -> FOLD=4: lanes 128 / hidden lanes 256, exactly MXU-shaped).
    fold = _LANES // D if (D < _LANES and _LANES % D == 0) else 1

    sine = sine.astype(jnp.int32)
    Bp = _round_up(B, fold)
    if Bp != B:                                  # tiny pad: at most fold-1 rows
        embed = jnp.pad(embed, ((0, Bp - B), (0, 0)))
        sine = jnp.pad(sine, ((0, Bp - B),))
    Bf = Bp // fold
    DL, HL = fold * D, fold * H

    emb_f = embed.reshape(Bf, DL)                # free row-major reshape
    sine_f = sine.reshape(Bf, fold)

    # Split the concat-folded weight and block-diagonalize once on the host.
    w1e = w1[:D]                                 # (D, H)  embed part
    w1s = w1[D:D + 1]                            # (1, H)  sine column
    W1_bd = _block_diag(w1e, fold)               # (DL, HL)
    W1s_bd = _block_diag(w1s, fold)              # (fold, HL)
    B1_t = jnp.tile(b1.reshape(1, H), (1, fold)) # (1, HL)
    W2_bd = _block_diag(w2, fold)                # (HL, DL)
    B2_t = jnp.tile(b2.reshape(1, D), (1, fold)) # (1, DL)

    TBf = _choose_row_tile(Bf, max_row_tile)
    grid = (pl.cdiv(Bf, TBf),)                   # ragged last block handled by Pallas

    kernel = build_sine_embellisher_kernel(effective_max, use_tanh)

    cost = pl.CostEstimate(
        flops=2 * Bp * (D * H + H * D) + 2 * Bp * H,
        transcendentals=Bp * H if use_tanh else 0,
        bytes_accessed=4 * (2 * Bp * D + Bp + (D + 1) * H + H * D + H + D),
    )

    out_f = pl.pallas_call(
        kernel,
        out_shape=jax.ShapeDtypeStruct((Bf, DL), embed.dtype),
        grid_spec=pltpu.PrefetchScalarGridSpec(
            num_scalar_prefetch=0,
            grid=grid,
            in_specs=[
                pl.BlockSpec((TBf, fold), lambda i: (i, 0)),   # folded sine
                pl.BlockSpec((TBf, DL), lambda i: (i, 0)),     # folded embeds
                pl.BlockSpec((DL, HL), lambda i: (0, 0)),      # W1 (embed, block-diag)
                pl.BlockSpec((fold, HL), lambda i: (0, 0)),    # W1 (sine, block-diag)
                pl.BlockSpec((1, HL), lambda i: (0, 0)),       # b1 (tiled)
                pl.BlockSpec((HL, DL), lambda i: (0, 0)),      # W2 (block-diag)
                pl.BlockSpec((1, DL), lambda i: (0, 0)),       # b2 (tiled)
            ],
            out_specs=pl.BlockSpec((TBf, DL), lambda i: (i, 0)),
        ),
        compiler_params=pltpu.CompilerParams(
            dimension_semantics=("parallel",)),
        cost_estimate=cost,
    )(sine_f, emb_f, W1_bd, W1s_bd, B1_t, W2_bd, B2_t)

    out = out_f.reshape(Bp, D)                   # free row-major reshape back
    return out if Bp == B else out[:B]


if __name__ == "__main__":
    key = jax.random.PRNGKey(0)
    D = 32
    H = D * BOTTLENECK_EXPANSION_RATIO // 2        # 64
    EFFECTIVE_MAX = 10
    B = 16

    k1, k2, k3, k4, k5 = jax.random.split(key, 5)
    w1 = 0.3 * jax.random.normal(k1, (D + 1, H), jnp.float32)
    b1 = 0.1 * jax.random.normal(k2, (H,), jnp.float32)
    w2 = 0.3 * jax.random.normal(k3, (H, D), jnp.float32)
    b2 = 0.1 * jax.random.normal(k4, (D,), jnp.float32)
    embed = jax.random.normal(k5, (B, D), jnp.float32)
    sine = jnp.asarray([0, 1, 2, 3, 255, 7, 10, 255, 4, 5, 6, 8, 9, 2, 255, 0],
                       jnp.int32)

    out = sine_embellisher_forward(
        sine, embed, w1, b1, w2, b2,
        effective_max=EFFECTIVE_MAX, use_tanh=USE_TANH)
    out = jax.block_until_ready(out)

    # ---- pure-numpy reference mirroring the PyTorch forward (per row) -------
    W1, B1, W2, B2 = map(np.asarray, (w1, b1, w2, b2))
    E = np.asarray(embed)
    S = np.asarray(sine)
    ref = np.zeros((B, D), np.float32)
    for i in range(B):
        sine_float = float(EFFECTIVE_MAX) if int(S[i]) == 255 else float(S[i])
        val = sine_float / EFFECTIVE_MAX
        x = np.concatenate([E[i], np.array([val], np.float32)])
        h = x @ W1 + B1
        h = np.tanh(h) if USE_TANH else np.maximum(h, 0.0)
        ref[i] = h @ W2 + B2

    np.testing.assert_allclose(np.asarray(out), ref, rtol=2e-3, atol=2e-3)
    print("KERNEL_OK")
</pallas_src>

<mosaic_0001>
module attributes {stable_mosaic.version = 11 : i64} {
  func.func @kernel(%arg0: i32, %arg1: memref<4x4xi32, #tpu.memory_space<vmem>>, %arg2: memref<4x128xf32, #tpu.memory_space<vmem>>, %arg3: memref<128x256xf32, #tpu.memory_space<vmem>>, %arg4: memref<4x256xf32, #tpu.memory_space<vmem>>, %arg5: memref<1x256xf32, #tpu.memory_space<vmem>>, %arg6: memref<256x128xf32, #tpu.memory_space<vmem>>, %arg7: memref<1x128xf32, #tpu.memory_space<vmem>>, %arg8: memref<4x128xf32, #tpu.memory_space<vmem>>) attributes {dimension_semantics = [#tpu.dimension_semantics<parallel>], iteration_bounds = array<i64: 1>, scalar_prefetch = 0 : i64, scratch_operands = 0 : i64, tpu.core_type = #tpu.core_type<tc>, window_params = [{transform_indices = @transform_0, window_bounds = array<i64: 4, 4>}, {transform_indices = @transform_1, window_bounds = array<i64: 4, 128>}, {pipeline_mode = #tpu.pipeline_mode<synchronous>, transform_indices = @transform_2, window_bounds = array<i64: 128, 256>}, {pipeline_mode = #tpu.pipeline_mode<synchronous>, transform_indices = @transform_3, window_bounds = array<i64: 4, 256>}, {pipeline_mode = #tpu.pipeline_mode<synchronous>, transform_indices = @transform_4, window_bounds = array<i64: 1, 256>}, {pipeline_mode = #tpu.pipeline_mode<synchronous>, transform_indices = @transform_5, window_bounds = array<i64: 256, 128>}, {pipeline_mode = #tpu.pipeline_mode<synchronous>, transform_indices = @transform_6, window_bounds = array<i64: 1, 128>}, {transform_indices = @transform_7, window_bounds = array<i64: 4, 128>}]} {
    %c0 = arith.constant 0 : index
    %c0_0 = arith.constant 0 : index
    %0 = vector.load %arg1[%c0, %c0_0] : memref<4x4xi32, #tpu.memory_space<vmem>>, vector<4x4xi32>
    %c255_i32 = arith.constant 255 : i32
    %1 = vector.broadcast %c255_i32 : i32 to vector<4x4xi32>
    %2 = arith.cmpi eq, %0, %1 : vector<4x4xi32>
    %3 = arith.sitofp %0 : vector<4x4xi32> to vector<4x4xf32>
    %cst = arith.constant 1.000000e+01 : f32
    %4 = vector.broadcast %cst : f32 to vector<4x4xf32>
    %5 = arith.select %2, %4, %3 : vector<4x4xi1>, vector<4x4xf32>
    %cst_1 = arith.constant 1.000000e-01 : f32
    %6 = vector.broadcast %cst_1 : f32 to vector<4x4xf32>
    %7 = arith.mulf %5, %6 : vector<4x4xf32>
    %c0_2 = arith.constant 0 : index
    %c0_3 = arith.constant 0 : index
    %8 = vector.load %arg2[%c0_2, %c0_3] : memref<4x128xf32, #tpu.memory_space<vmem>>, vector<4x128xf32>
    %c0_4 = arith.constant 0 : index
    %c0_5 = arith.constant 0 : index
    %9 = vector.load %arg3[%c0_4, %c0_5] : memref<128x256xf32, #tpu.memory_space<vmem>>, vector<128x256xf32>
    %cst_6 = arith.constant dense<0.000000e+00> : vector<4x256xf32>
    %10 = tpu.matmul %8, %9, %cst_6 {dimension_numbers = #tpu.dot_dimension_numbers<[1], [0], [0], [1], [0, 0, 1, 1], [], []>} : vector<4x128xf32>, vector<128x256xf32>, vector<4x256xf32> -> vector<4x256xf32>
    %c0_7 = arith.constant 0 : index
    %c0_8 = arith.constant 0 : index
    %11 = vector.load %arg4[%c0_7, %c0_8] : memref<4x256xf32, #tpu.memory_space<vmem>>, vector<4x256xf32>
    %cst_9 = arith.constant dense<0.000000e+00> : vector<4x256xf32>
    %12 = tpu.matmul %7, %11, %cst_9 {dimension_numbers = #tpu.dot_dimension_numbers<[1], [0], [0], [1], [0, 0, 1, 1], [], []>} : vector<4x4xf32>, vector<4x256xf32>, vector<4x256xf32> -> vector<4x256xf32>
    %13 = arith.addf %10, %12 : vector<4x256xf32>
    %c0_10 = arith.constant 0 : index
    %c0_11 = arith.constant 0 : index
    %14 = vector.load %arg5[%c0_10, %c0_11] : memref<1x256xf32, #tpu.memory_space<vmem>>, vector<1x256xf32>
    %15 = vector.broadcast %14 : vector<1x256xf32> to vector<4x256xf32>
    %16 = arith.addf %13, %15 : vector<4x256xf32>
    %17 = math.tanh %16 : vector<4x256xf32>
    %c0_12 = arith.constant 0 : index
    %c0_13 = arith.constant 0 : index
    %18 = vector.load %arg6[%c0_12, %c0_13] : memref<256x128xf32, #tpu.memory_space<vmem>>, vector<256x128xf32>
    %cst_14 = arith.constant dense<0.000000e+00> : vector<4x128xf32>
    %19 = tpu.matmul %17, %18, %cst_14 {dimension_numbers = #tpu.dot_dimension_numbers<[1], [0], [0], [1], [0, 0, 1, 1], [], []>} : vector<4x256xf32>, vector<256x128xf32>, vector<4x128xf32> -> vector<4x128xf32>
    %c0_15 = arith.constant 0 : index
    %c0_16 = arith.constant 0 : index
    %20 = vector.load %arg7[%c0_15, %c0_16] : memref<1x128xf32, #tpu.memory_space<vmem>>, vector<1x128xf32>
    %21 = vector.broadcast %20 : vector<1x128xf32> to vector<4x128xf32>
    %22 = arith.addf %19, %21 : vector<4x128xf32>
    %c0_17 = arith.constant 0 : index
    %c0_18 = arith.constant 0 : index
    %23 = vector.load %arg8[%c0_17, %c0_18] : memref<4x128xf32, #tpu.memory_space<vmem>>, vector<4x128xf32>
    tpu.vector_store %arg8[%c0_17, %c0_18], %22 {strides = array<i32>} : memref<4x128xf32, #tpu.memory_space<vmem>>, vector<4x128xf32>,
    return
  }
  func.func @transform_0(%arg0: i32) -> (i32, i32) {
    %c0_i32 = arith.constant 0 : i32
    %c0_i32_0 = arith.constant 0 : i32
    return %arg0, %c0_i32 : i32, i32
  }
  func.func @transform_1(%arg0: i32) -> (i32, i32) {
    %c0_i32 = arith.constant 0 : i32
    %c0_i32_0 = arith.constant 0 : i32
    return %arg0, %c0_i32 : i32, i32
  }
  func.func @transform_2(%arg0: i32) -> (i32, i32) {
    %c0_i32 = arith.constant 0 : i32
    %c0_i32_0 = arith.constant 0 : i32
    %c0_i32_1 = arith.constant 0 : i32
    return %c0_i32, %c0_i32_0 : i32, i32
  }
  func.func @transform_3(%arg0: i32) -> (i32, i32) {
    %c0_i32 = arith.constant 0 : i32
    %c0_i32_0 = arith.constant 0 : i32
    %c0_i32_1 = arith.constant 0 : i32
    return %c0_i32, %c0_i32_0 : i32, i32
  }
  func.func @transform_4(%arg0: i32) -> (i32, i32) {
    %c0_i32 = arith.constant 0 : i32
    %c0_i32_0 = arith.constant 0 : i32
    %c0_i32_1 = arith.constant 0 : i32
    return %c0_i32, %c0_i32_0 : i32, i32
  }
  func.func @transform_5(%arg0: i32) -> (i32, i32) {
    %c0_i32 = arith.constant 0 : i32
    %c0_i32_0 = arith.constant 0 : i32
    %c0_i32_1 = arith.constant 0 : i32
    return %c0_i32, %c0_i32_0 : i32, i32
  }
  func.func @transform_6(%arg0: i32) -> (i32, i32) {
    %c0_i32 = arith.constant 0 : i32
    %c0_i32_0 = arith.constant 0 : i32
    %c0_i32_1 = arith.constant 0 : i32
    return %c0_i32, %c0_i32_0 : i32, i32
  }
  func.func @transform_7(%arg0: i32) -> (i32, i32) {
    %c0_i32 = arith.constant 0 : i32
    %c0_i32_0 = arith.constant 0 : i32
    return %arg0, %c0_i32 : i32, i32
  }
}

</mosaic_0001>

<llo_original>
// kernel: tpu_custom_call.1
$region0: #{tpu_custom_call.1}
  #allocation0 [shape = 'u32[]', space=smem, size = 0x4, offset = 0x4, fixed_abs, tag = 'smem constant byte address 0x4 - core index']
  #allocation1 [shape = 'u32[72,128]{1,0:T(1,128)}', space=vmem, size = 0x9000, scoped, tag = 'internal scratch']
  %s0 = inlined_call_operand.hbm [shape: s32[4,4], index: 0, kind: input, shape index: {}]
  %s1 = inlined_call_operand.hbm [shape: f32[4,128], index: 1, kind: input, shape index: {}]
  %s2 = inlined_call_operand.hbm [shape: f32[128,256], index: 2, kind: input, shape index: {}]
  %s3 = inlined_call_operand.hbm [shape: f32[4,256], index: 3, kind: input, shape index: {}]
  %s4 = inlined_call_operand.vmem [shape: f32[1,256], index: 4, kind: input, shape index: {}]
  %s5 = inlined_call_operand.hbm [shape: f32[256,128], index: 5, kind: input, shape index: {}]
  %s6 = inlined_call_operand.vmem [shape: f32[1,128], index: 6, kind: input, shape index: {}]
  %s7 = inlined_call_operand.hbm [shape: f32[4,128], index: 7, kind: output, shape index: {}]
  %s8 = sld [smem:[#allocation0]]
  $region58: #{tpu_custom_call.1} parent=0
    _
  %s10 = ssub.s32 1, %s8
  %s11 = scalar_select 0, %s10, %s8
  $region1: #{tpu_custom_call.1} parent=0
    #allocation2 [shape = 'u8[2048]{0}', space=vmem, size = 0x800, scoped, tag = 'input window, operand 0, single buffered']
    #allocation3 [shape = 's32[1]{0}', space=sflag, size = 0x4, scoped, tag = 'scoped memory for tpu_custom_call.1']
    #allocation4 [shape = 's32[1]{0}', space=sflag, size = 0x4, scoped, tag = 'scoped memory for tpu_custom_call.1']
    #allocation5 [shape = 'u8[2048]{0}', space=vmem, size = 0x800, scoped, tag = 'input window, operand 1, single buffered']
    #allocation6 [shape = 's32[1]{0}', space=sflag, size = 0x4, scoped, tag = 'scoped memory for tpu_custom_call.1']
    #allocation7 [shape = 'u8[131072]{0}', space=vmem, size = 0x20000, scoped, tag = 'input window, operand 2, single buffered']
    #allocation8 [shape = 'u8[4096]{0}', space=vmem, size = 0x1000, scoped, tag = 'input window, operand 3, single buffered']
    #allocation9 [shape = 's32[1]{0}', space=sflag, size = 0x4, scoped, tag = 'scoped memory for tpu_custom_call.1']
    #allocation10 [shape = 'u8[131072]{0}', space=vmem, size = 0x20000, scoped, tag = 'input window, operand 5, single buffered']
    #allocation11 [shape = 'u8[2048]{0}', space=vmem, size = 0x800, scoped, tag = 'output window, operand 0, single buffered']
    %12 = vsyncpa [#allocation3], 0
    %13 = vsyncpa [#allocation6], 0
    %14 = vsyncpa [#allocation9], 0
    %15 = vsyncpa [#allocation4], 0
    // Predicated region
    $region2: #{tpu_custom_call.1} parent=1 // pred_check
      _
    $region3: #{tpu_custom_call.1} parent=1 // pred_check_branch
      %17 = sbr.rel (0) target = $region5
    $region4: #{tpu_custom_call.1} parent=1 // pred_region
      %19 = vsyncadd [#allocation3], 0
      %s21 = sshll.u32 %s0, 4
      %s22 = int_to_ptr.hbm [resolvable:$true] %s21
      %s23 = sshll.u32 [#allocation2], 4
      %s24 = int_to_ptr.vmem [resolvable:$true] %s23
      %26 = dma.hbm_to_vmem [thread:$0]  %s22, 64, %s24, [#allocation3]
    $region5: #{tpu_custom_call.1} parent=1 // pred_fallthru
      _
    // Predicated region
    $region6: #{tpu_custom_call.1} parent=1 // pred_check
      _
    $region7: #{tpu_custom_call.1} parent=1 // pred_check_branch
      %28 = sbr.rel (0) target = $region9
    $region8: #{tpu_custom_call.1} parent=1 // pred_region
      %30 = vsyncadd [#allocation6], 0
      %s32 = sshll.u32 %s1, 4
      %s33 = int_to_ptr.hbm [resolvable:$true] %s32
      %s34 = sshll.u32 [#allocation5], 4
      %s35 = int_to_ptr.vmem [resolvable:$true] %s34
      %37 = dma.hbm_to_vmem [thread:$0]  %s33, 64, %s35, [#allocation6]
    $region9: #{tpu_custom_call.1} parent=1 // pred_fallthru
      _
    // Predicated region
    $region10: #{tpu_custom_call.1} parent=1 // pred_check
      _
    $region11: #{tpu_custom_call.1} parent=1 // pred_check_branch
      %39 = sbr.rel (0) target = $region13
    $region12: #{tpu_custom_call.1} parent=1 // pred_region
      %41 = vsyncadd [#allocation6], 0
      %s42 = sshll.u32 %s2, 4
      %s43 = int_to_ptr.hbm [resolvable:$true] %s42
      %s44 = sshll.u32 [#allocation7], 4
      %s45 = int_to_ptr.vmem [resolvable:$true] %s44
      %50 = dma.hbm_to_vmem [thread:$0]  %s43, 4096, %s45, [#allocation6], 256, 256, 16
    $region13: #{tpu_custom_call.1} parent=1 // pred_fallthru
      _
    // Predicated region
    $region14: #{tpu_custom_call.1} parent=1 // pred_check
      _
    $region15: #{tpu_custom_call.1} parent=1 // pred_check_branch
      %52 = sbr.rel (0) target = $region17
    $region16: #{tpu_custom_call.1} parent=1 // pred_region
      %54 = vsyncadd [#allocation9], 0
      %s56 = sshll.u32 %s3, 4
      %s57 = int_to_ptr.hbm [resolvable:$true] %s56
      %s58 = sshll.u32 [#allocation8], 4
      %s59 = int_to_ptr.vmem [resolvable:$true] %s58
      %61 = dma.hbm_to_vmem [thread:$0]  %s57, 128, %s59, [#allocation9]
    $region17: #{tpu_custom_call.1} parent=1 // pred_fallthru
      _
    // Predicated region
    $region18: #{tpu_custom_call.1} parent=1 // pred_check
      _
    $region19: #{tpu_custom_call.1} parent=1 // pred_check_branch
      %63 = sbr.rel (0) target = $region21
    $region20: #{tpu_custom_call.1} parent=1 // pred_region
      _
    $region21: #{tpu_custom_call.1} parent=1 // pred_fallthru
      _
    // Predicated region
    $region22: #{tpu_custom_call.1} parent=1 // pred_check
      _
    $region23: #{tpu_custom_call.1} parent=1 // pred_check_branch
      %65 = sbr.rel (0) target = $region25
    $region24: #{tpu_custom_call.1} parent=1 // pred_region
      %67 = vsyncadd [#allocation9], 0
      %s68 = sshll.u32 %s5, 4
      %s69 = int_to_ptr.hbm [resolvable:$true] %s68
      %s70 = sshll.u32 [#allocation10], 4
      %s71 = int_to_ptr.vmem [resolvable:$true] %s70
      %76 = dma.hbm_to_vmem [thread:$0]  %s69, 4096, %s71, [#allocation9], 128, 128, 8
    $region25: #{tpu_custom_call.1} parent=1 // pred_fallthru
      _
    // Predicated region
    $region26: #{tpu_custom_call.1} parent=1 // pred_check
      _
    $region27: #{tpu_custom_call.1} parent=1 // pred_check_branch
      %78 = sbr.rel (0) target = $region29
    $region28: #{tpu_custom_call.1} parent=1 // pred_region
      _
    $region29: #{tpu_custom_call.1} parent=1 // pred_fallthru
      _
    // Predicated region
    $region30: #{tpu_custom_call.1} parent=1 // pred_check
      _
    $region31: #{tpu_custom_call.1} parent=1 // pred_check_branch
      %80 = sbr.rel (0) target = $region33
    $region32: #{tpu_custom_call.1} parent=1 // pred_region
      %82 = dma.done [#allocation3], 64
    $region33: #{tpu_custom_call.1} parent=1 // pred_fallthru
      _
    // Predicated region
    $region34: #{tpu_custom_call.1} parent=1 // pred_check
      _
    $region35: #{tpu_custom_call.1} parent=1 // pred_check_branch
      %84 = sbr.rel (0) target = $region37
    $region36: #{tpu_custom_call.1} parent=1 // pred_region
      %86 = dma.done [#allocation6], 64
    $region37: #{tpu_custom_call.1} parent=1 // pred_fallthru
      _
    // Predicated region
    $region38: #{tpu_custom_call.1} parent=1 // pred_check
      _
    $region39: #{tpu_custom_call.1} parent=1 // pred_check_branch
      %88 = sbr.rel (0) target = $region41
    $region40: #{tpu_custom_call.1} parent=1 // pred_region
      %90 = dma.done [#allocation6], 4096
    $region41: #{tpu_custom_call.1} parent=1 // pred_fallthru
      _
    // Predicated region
    $region42: #{tpu_custom_call.1} parent=1 // pred_check
      _
    $region43: #{tpu_custom_call.1} parent=1 // pred_check_branch
      %92 = sbr.rel (0) target = $region45
    $region44: #{tpu_custom_call.1} parent=1 // pred_region
      %94 = dma.done [#allocation9], 128
    $region45: #{tpu_custom_call.1} parent=1 // pred_fallthru
      _
    // Predicated region
    $region46: #{tpu_custom_call.1} parent=1 // pred_check
      _
    $region47: #{tpu_custom_call.1} parent=1 // pred_check_branch
      %96 = sbr.rel (0) target = $region49
    $region48: #{tpu_custom_call.1} parent=1 // pred_region
      %98 = dma.done [#allocation9], 4096
    $region49: #{tpu_custom_call.1} parent=1 // pred_fallthru
      _
    %v99 = vld [vmem:[#allocation2] sm:$0xf]
    %vm100 = vcmp.eq.s32.totalorder %v99, 255
    %v101 = vcvt.s32.f32 %v99
    %v102 = vsel %vm100, 10.0, %v101
    %v103 = vmul.f32 %v102, 0.1
    %v104 = vld [vmem:[#allocation5] sm:$0xf]
    %v105 = vld [vmem:[#allocation7] sm:$0xff]
    %v106 = vld [vmem:[#allocation7 + $0x8] sm:$0xff]
    %v107 = vld [vmem:[#allocation7 + $0x10] sm:$0xff]
    %v108 = vld [vmem:[#allocation7 + $0x18] sm:$0xff]
    %v109 = vld [vmem:[#allocation7 + $0x20] sm:$0xff]
    %v110 = vld [vmem:[#allocation7 + $0x28] sm:$0xff]
    %v111 = vld [vmem:[#allocation7 + $0x30] sm:$0xff]
    %v112 = vld [vmem:[#allocation7 + $0x38] sm:$0xff]
    %v113 = vld [vmem:[#allocation7 + $0x40] sm:$0xff]
    %v114 = vld [vmem:[#allocation7 + $0x48] sm:$0xff]
    %v115 = vld [vmem:[#allocation7 + $0x50] sm:$0xff]
    %v116 = vld [vmem:[#allocation7 + $0x58] sm:$0xff]
    %v117 = vld [vmem:[#allocation7 + $0x60] sm:$0xff]
    %v118 = vld [vmem:[#allocation7 + $0x68] sm:$0xff]
    %v119 = vld [vmem:[#allocation7 + $0x70] sm:$0xff]
    %v120 = vld [vmem:[#allocation7 + $0x78] sm:$0xff]
    %v121 = vld [vmem:[#allocation7 + $0x80] sm:$0xff]
    %v122 = vld [vmem:[#allocation7 + $0x88] sm:$0xff]
    %v123 = vld [vmem:[#allocation7 + $0x90] sm:$0xff]
    %v124 = vld [vmem:[#allocation7 + $0x98] sm:$0xff]
    %v125 = vld [vmem:[#allocation7 + $0xa0] sm:$0xff]
    %v126 = vld [vmem:[#allocation7 + $0xa8] sm:$0xff]
    %v127 = vld [vmem:[#allocation7 + $0xb0] sm:$0xff]
    %v128 = vld [vmem:[#allocation7 + $0xb8] sm:$0xff]
    %v129 = vld [vmem:[#allocation7 + $0xc0] sm:$0xff]
    %v130 = vld [vmem:[#allocation7 + $0xc8] sm:$0xff]
    %v131 = vld [vmem:[#allocation7 + $0xd0] sm:$0xff]
    %v132 = vld [vmem:[#allocation7 + $0xd8] sm:$0xff]
    %v133 = vld [vmem:[#allocation7 + $0xe0] sm:$0xff]
    %v134 = vld [vmem:[#allocation7 + $0xe8] sm:$0xff]
    %v135 = vld [vmem:[#allocation7 + $0xf0] sm:$0xff]
    %v136 = vld [vmem:[#allocation7 + $0xf8] sm:$0xff]
    %v137 = vld [vmem:[#allocation8] sm:$0xff]
    %139 = vst [vmem:[#allocation1] ss:$2 sm:$0xff] %v137
    %v140 = vld.sshfl [vmem:[#allocation1] sm:$0xff pattern:$0x75316420]
    %v141 = vld.sshfl [vmem:[#allocation1 + $0x8] sm:$0xff pattern:$0x75316420]
    %vm142 = vcmask 31744
    %v144 = vsel %vm142, %v103, 0
    %vm146 = vcmask 1043456
    %v147 = vsel %vm146, %v140, 0
    %v149 = vsel %vm146, %v141, 0
    %151 = vmatpush.msra.mxu0 0.0
    %152 = vmatpush.msra.mxu0 0.0
    %153 = vmatpush.msra.mxu0 0.0
    %154 = vmatpush.msra.mxu0 0.0
    %155 = vmatpush.msra.mxu0 0.0
    %156 = vmatpush.msra.mxu0 0.0
    %157 = vmatpush.msra.mxu0 0.0
    %158 = vmatpush.msra.mxu0 0.0
    %159 = vmatpush.msra.mxu0 0.0
    %160 = vmatpush.msra.mxu0 0.0
    %161 = vmatpush.msra.mxu0 0.0
    %162 = vmatpush.msra.mxu0 0.0
    %163 = vmatpush.msra.mxu0 0.0
    %164 = vmatpush.msra.mxu0 0.0
    %165 = vmatpush.msra.mxu0 0.0
    %166 = vmatpush.msra.mxu0 %v147
    %167 = vmatmul.f32.gmra.mxu0 %v144
    %v168 = vpop.f32.mrf.mxu0
    %v169 = vadd.f32 0.0, %v168
    %170 = vdwg.mxu0
    %171 = vmatpush.msra.mxu0 0.0
    %172 = vmatpush.msra.mxu0 0.0
    %173 = vmatpush.msra.mxu0 0.0
    %174 = vmatpush.msra.mxu0 0.0
    %175 = vmatpush.msra.mxu0 0.0
    %176 = vmatpush.msra.mxu0 0.0
    %177 = vmatpush.msra.mxu0 0.0
    %178 = vmatpush.msra.mxu0 0.0
    %179 = vmatpush.msra.mxu0 0.0
    %180 = vmatpush.msra.mxu0 0.0
    %181 = vmatpush.msra.mxu0 0.0
    %182 = vmatpush.msra.mxu0 0.0
    %183 = vmatpush.msra.mxu0 0.0
    %184 = vmatpush.msra.mxu0 0.0
    %185 = vmatpush.msra.mxu0 0.0
    %186 = vmatpush.msra.mxu0 %v149
    %187 = vmatmul.f32.gmra.mxu0 %v144
    %v188 = vpop.f32.mrf.mxu0
    %v189 = vadd.f32 0.0, %v188
    %190 = vdwg.mxu0
    %191 = vmatpush.msra.mxu0 %v135
    %192 = vmatpush.msra.mxu0 %v133
    %193 = vmatpush.msra.mxu0 %v131
    %194 = vmatpush.msra.mxu0 %v129
    %195 = vmatpush.msra.mxu0 %v127
    %196 = vmatpush.msra.mxu0 %v125
    %197 = vmatpush.msra.mxu0 %v123
    %198 = vmatpush.msra.mxu0 %v121
    %199 = vmatpush.msra.mxu0 %v119
    %200 = vmatpush.msra.mxu0 %v117
    %201 = vmatpush.msra.mxu0 %v115
    %202 = vmatpush.msra.mxu0 %v113
    %203 = vmatpush.msra.mxu0 %v111
    %204 = vmatpush.msra.mxu0 %v109
    %205 = vmatpush.msra.mxu0 %v107
    %206 = vmatpush.msra.mxu0 %v105
    %207 = vmatmul.f32.gmra.mxu0 %v104
    %v208 = vpop.f32.mrf.mxu0
    %v209 = vadd.f32 %v169, %v208
    %210 = vdwg.mxu0
    %211 = vmatpush.msra.mxu0 %v136
    %212 = vmatpush.msra.mxu0 %v134
    %213 = vmatpush.msra.mxu0 %v132
    %214 = vmatpush.msra.mxu0 %v130
    %215 = vmatpush.msra.mxu0 %v128
    %216 = vmatpush.msra.mxu0 %v126
    %217 = vmatpush.msra.mxu0 %v124
    %218 = vmatpush.msra.mxu0 %v122
    %219 = vmatpush.msra.mxu0 %v120
    %220 = vmatpush.msra.mxu0 %v118
    %221 = vmatpush.msra.mxu0 %v116
    %222 = vmatpush.msra.mxu0 %v114
    %223 = vmatpush.msra.mxu0 %v112
    %224 = vmatpush.msra.mxu0 %v110
    %225 = vmatpush.msra.mxu0 %v108
    %226 = vmatpush.msra.mxu0 %v106
    %227 = vmatmul.f32.gmra.mxu0 %v104
    %v228 = vpop.f32.mrf.mxu0
    %v229 = vadd.f32 %v189, %v228
    %230 = vdwg.mxu0
    %v231 = vld [vmem:[%s4] sm:$0x3]
    %v233 = vperm.slane %v231, 0
    %v234 = vperm.slane %v231, 1
    %v237 = vadd.f32 %v209, %v233
    %v238 = vadd.f32 %v229, %v234
    %v239 = vtanh.pop %v237
    %v240 = vtanh.pop %v238
    %v241 = vld [vmem:[#allocation10] sm:$0xff]
    %v242 = vld [vmem:[#allocation10 + $0x8] sm:$0xff]
    %v243 = vld [vmem:[#allocation10 + $0x10] sm:$0xff]
    %v244 = vld [vmem:[#allocation10 + $0x18] sm:$0xff]
    %v245 = vld [vmem:[#allocation10 + $0x20] sm:$0xff]
    %v246 = vld [vmem:[#allocation10 + $0x28] sm:$0xff]
    %v247 = vld [vmem:[#allocation10 + $0x30] sm:$0xff]
    %v248 = vld [vmem:[#allocation10 + $0x38] sm:$0xff]
    %v249 = vld [vmem:[#allocation10 + $0x40] sm:$0xff]
    %v250 = vld [vmem:[#allocation10 + $0x48] sm:$0xff]
    %v251 = vld [vmem:[#allocation10 + $0x50] sm:$0xff]
    %v252 = vld [vmem:[#allocation10 + $0x58] sm:$0xff]
    %v253 = vld [vmem:[#allocation10 + $0x60] sm:$0xff]
    %v254 = vld [vmem:[#allocation10 + $0x68] sm:$0xff]
    %v255 = vld [vmem:[#allocation10 + $0x70] sm:$0xff]
    %v256 = vld [vmem:[#allocation10 + $0x78] sm:$0xff]
    %v257 = vld [vmem:[#allocation10 + $0x80] sm:$0xff]
    %v258 = vld [vmem:[#allocation10 + $0x88] sm:$0xff]
    %v259 = vld [vmem:[#allocation10 + $0x90] sm:$0xff]
    %v260 = vld [vmem:[#allocation10 + $0x98] sm:$0xff]
    %v261 = vld [vmem:[#allocation10 + $0xa0] sm:$0xff]
    %v262 = vld [vmem:[#allocation10 + $0xa8] sm:$0xff]
    %v263 = vld [vmem:[#allocation10 + $0xb0] sm:$0xff]
    %v264 = vld [vmem:[#allocation10 + $0xb8] sm:$0xff]
    %v265 = vld [vmem:[#allocation10 + $0xc0] sm:$0xff]
    %v266 = vld [vmem:[#allocation10 + $0xc8] sm:$0xff]
    %v267 = vld [vmem:[#allocation10 + $0xd0] sm:$0xff]
    %v268 = vld [vmem:[#allocation10 + $0xd8] sm:$0xff]
    %v269 = vld [vmem:[#allocation10 + $0xe0] sm:$0xff]
    %v270 = vld [vmem:[#allocation10 + $0xe8] sm:$0xff]
    %v271 = vld [vmem:[#allocation10 + $0xf0] sm:$0xff]
    %v272 = vld [vmem:[#allocation10 + $0xf8] sm:$0xff]
    %v273 = vld [vmem:[%s6] sm:$0x1]
    %v275 = vperm.slane %v273, 0
    %277 = vmatpush.msra.mxu0 %v256
    %278 = vmatpush.msra.mxu0 %v255
    %279 = vmatpush.msra.mxu0 %v254
    %280 = vmatpush.msra.mxu0 %v253
    %281 = vmatpush.msra.mxu0 %v252
    %282 = vmatpush.msra.mxu0 %v251
    %283 = vmatpush.msra.mxu0 %v250
    %284 = vmatpush.msra.mxu0 %v249
    %285 = vmatpush.msra.mxu0 %v248
    %286 = vmatpush.msra.mxu0 %v247
    %287 = vmatpush.msra.mxu0 %v246
    %288 = vmatpush.msra.mxu0 %v245
    %289 = vmatpush.msra.mxu0 %v244
    %290 = vmatpush.msra.mxu0 %v243
    %291 = vmatpush.msra.mxu0 %v242
    %292 = vmatpush.msra.mxu0 %v241
    %293 = vmatmul.f32.gmra.mxu0 %v239
    %v294 = vpop.f32.mrf.mxu0
    %v295 = vadd.f32 %v275, %v294
    %296 = vdwg.mxu0
    %297 = vmatpush.msra.mxu0 %v272
    %298 = vmatpush.msra.mxu0 %v271
    %299 = vmatpush.msra.mxu0 %v270
    %300 = vmatpush.msra.mxu0 %v269
    %301 = vmatpush.msra.mxu0 %v268
    %302 = vmatpush.msra.mxu0 %v267
    %303 = vmatpush.msra.mxu0 %v266
    %304 = vmatpush.msra.mxu0 %v265
    %305 = vmatpush.msra.mxu0 %v264
    %306 = vmatpush.msra.mxu0 %v263
    %307 = vmatpush.msra.mxu0 %v262
    %308 = vmatpush.msra.mxu0 %v261
    %309 = vmatpush.msra.mxu0 %v260
    %310 = vmatpush.msra.mxu0 %v259
    %311 = vmatpush.msra.mxu0 %v258
    %312 = vmatpush.msra.mxu0 %v257
    %313 = vmatmul.f32.gmra.mxu0 %v240
    %v314 = vpop.f32.mrf.mxu0
    %v315 = vadd.f32 %v295, %v314
    %316 = vdwg.mxu0
    %317 = vst [vmem:[#allocation11] sm:$0xf] %v315
    // Predicated region
    $region50: #{tpu_custom_call.1} parent=1 // pred_check
      _
    $region51: #{tpu_custom_call.1} parent=1 // pred_check_branch
      %319 = sbr.rel (0) target = $region53
    $region52: #{tpu_custom_call.1} parent=1 // pred_region
      %321 = vsyncadd [#allocation4], 0
      %s323 = sshll.u32 [#allocation11], 4
      %s324 = int_to_ptr.vmem [resolvable:$true] %s323
      %s325 = sshll.u32 %s7, 4
      %s326 = int_to_ptr.hbm [resolvable:$true] %s325
      %328 = dma.vmem_to_hbm [thread:$0]  %s324, 64, %s326, [#allocation4]
    $region53: #{tpu_custom_call.1} parent=1 // pred_fallthru
      _
    // Predicated region
    $region54: #{tpu_custom_call.1} parent=1 // pred_check
      _
    $region55: #{tpu_custom_call.1} parent=1 // pred_check_branch
      %330 = sbr.rel (0) target = $region57
    $region56: #{tpu_custom_call.1} parent=1 // pred_region
      %332 = dma.done [#allocation4], 64
    $region57: #{tpu_custom_call.1} parent=1 // pred_fallthru
      _
    %333 = vsyncpa [#allocation3], 1
    %334 = vsyncpa [#allocation6], 1
    %335 = vsyncpa [#allocation9], 1
    %336 = vsyncpa [#allocation4], 1

</llo_original>
